<compile_context>
chip_gen: v7x
topology: tpu7x:2x2x1
jax: 0.10.0
libtpu: 0.0.40
codegen_flags: <defaults>
</compile_context>

<pallas_src>
import functools

import jax
import jax.numpy as jnp
from jax.experimental import pallas as pl
from jax.experimental.pallas import tpu as pltpu


def _round_up(x, m):
    return (x + m - 1) // m * m


def _highway_kernel(x_ref, w_ref, b_ref, o_ref):
    """Grid = (batch_tiles, n_layers); layer axis is the inner sequential one.

    x_ref: (TILE_B, Fp)    input activations (only read at layer 0)
    w_ref: (1, Fp, 3*Fp)   packed [gate | linear | nonlinear] weights
    b_ref: (1, 1, 3*Fp)    packed biases
    o_ref: (TILE_B, Fp)    VMEM-resident activation / final output
    """
    layer = pl.program_id(1)
    Fp = o_ref.shape[-1]

    # Initialize the resident activation from the input at the first layer.
    @pl.when(layer == 0)
    def _():
        o_ref[...] = x_ref[...]

    x = o_ref[...]

    # One fused MXU matmul for all three projections, f32 accumulation.
    h = jnp.dot(x, w_ref[0], preferred_element_type=jnp.float32) + b_ref[0]

    gate = jax.nn.sigmoid(h[:, :Fp])          # EUP slot
    lin = h[:, Fp:2 * Fp]
    nl = jnp.maximum(h[:, 2 * Fp:], 0.0)      # func = ReLU

    # out = gate*nl + (1-gate)*lin  ==  lin + gate*(nl - lin)   (fewer VPU ops)
    o_ref[...] = (lin + gate * (nl - lin)).astype(o_ref.dtype)


@functools.partial(jax.jit, static_argnames=("tile_b",))
def highway_forward(x, w_packed, b_packed, *, tile_b=256):
    """x: (B, F) f32; w_packed: (L, Fp, 3*Fp); b_packed: (L, 1, 3*Fp).

    Assumes in_features == out_features (required by the module for L > 1).
    """
    B, F = x.shape
    L, Fp, _ = w_packed.shape

    # Pad batch to sublane multiple / batch tile.
    Bp8 = _round_up(max(B, 1), 8)
    TILE_B = tile_b if Bp8 >= tile_b else Bp8
    Bp = _round_up(Bp8, TILE_B)

    x_pad = jnp.zeros((Bp, Fp), x.dtype).at[:B, :F].set(x)

    grid = (Bp // TILE_B, L)

    itemsize = 4  # f32
    est_vmem = itemsize * (
        2 * (Fp * 3 * Fp + 3 * Fp)   # double-buffered weight + bias blocks
        + 2 * 2 * TILE_B * Fp        # input + resident output blocks
        + 2 * TILE_B * 3 * Fp        # fused-matmul intermediate headroom
    )
    vmem_limit = int(min(max(2 * est_vmem, 32 * 2 ** 20), 64 * 2 ** 20))

    cost = pl.CostEstimate(
        flops=2 * Bp * Fp * 3 * Fp * L,
        transcendentals=Bp * Fp * L,
        bytes_accessed=itemsize * (w_packed.size + b_packed.size + 2 * Bp * Fp),
    )

    out = pl.pallas_call(
        _highway_kernel,
        out_shape=jax.ShapeDtypeStruct((Bp, Fp), x.dtype),
        grid_spec=pltpu.PrefetchScalarGridSpec(
            num_scalar_prefetch=0,
            grid=grid,
            in_specs=[
                pl.BlockSpec((TILE_B, Fp), lambda b, l: (b, 0)),
                pl.BlockSpec((1, Fp, 3 * Fp), lambda b, l: (l, 0, 0)),
                pl.BlockSpec((1, 1, 3 * Fp), lambda b, l: (l, 0, 0)),
            ],
            out_specs=pl.BlockSpec((TILE_B, Fp), lambda b, l: (b, 0)),
        ),
        compiler_params=pltpu.CompilerParams(
            dimension_semantics=("parallel", "arbitrary"),
            vmem_limit_bytes=vmem_limit,
        ),
        cost_estimate=cost,
    )(x_pad, w_packed, b_packed)

    return out[:B, :F]


def init_highway_params(key, in_features, out_features, n_layers):
    """Deterministic init mimicking nn.Linear's U(-1/sqrt(in), 1/sqrt(in)).

    Weights stored as (in_features, out_features) so the kernel computes x @ W
    (equivalent to PyTorch's y = x @ W.T + b).
    """
    bound = 1.0 / (in_features ** 0.5)
    params = []
    for _ in range(n_layers):
        layer = {}
        for name in ("gate", "linear", "nonlinear"):
            key, kw, kb = jax.random.split(key, 3)
            w = jax.random.uniform(kw, (in_features, out_features),
                                   jnp.float32, -bound, bound)
            b = jax.random.uniform(kb, (1, out_features),
                                   jnp.float32, -bound, bound)
            layer[name] = (w, b)
        params.append(layer)
    return params


def pack_highway_params(params, in_features, out_features):
    """Zero-pad features to a multiple of 128 and pack the three projections
    per layer into one (L, Fp, 3*Fp) weight slab + (L, 1, 3*Fp) bias slab,
    layout [gate | linear | nonlinear]."""
    L = len(params)
    Fp_in = _round_up(in_features, 128)
    Fp_out = _round_up(out_features, 128)
    assert Fp_in == Fp_out, "highway layers need matching padded feature dims"
    Fp = Fp_out
    w_packed = jnp.zeros((L, Fp, 3 * Fp), jnp.float32)
    b_packed = jnp.zeros((L, 1, 3 * Fp), jnp.float32)
    for l, layer in enumerate(params):
        for j, name in enumerate(("gate", "linear", "nonlinear")):
            w, b = layer[name]
            w_packed = w_packed.at[
                l, :in_features, j * Fp:j * Fp + out_features].set(w)
            b_packed = b_packed.at[
                l, 0, j * Fp:j * Fp + out_features].set(b[0])
    return w_packed, b_packed


def highway_reference(x, params):
    """Pure-JAX reference matching the PyTorch forward (func = ReLU)."""
    for layer in params:
        wg, bg = layer["gate"]
        wl, bl = layer["linear"]
        wn, bn = layer["nonlinear"]
        gate = jax.nn.sigmoid(x @ wg + bg)
        lin = x @ wl + bl
        nl = jax.nn.relu(x @ wn + bn)
        x = gate * nl + (1.0 - gate) * lin
    return x


if __name__ == "__main__":
    # Small shapes consistent with the module: batch=8, hidden=32, 2 layers
    # (in_features == out_features so x can pass through multiple layers).
    B = 8
    F = 32
    N_LAYERS = 2

    key = jax.random.PRNGKey(0)
    key, kx = jax.random.split(key)
    x = jax.random.normal(kx, (B, F), jnp.float32)

    params = init_highway_params(key, F, F, N_LAYERS)
    w_packed, b_packed = pack_highway_params(params, F, F)

    out = highway_forward(x, w_packed, b_packed)
    out = jax.block_until_ready(out)

    ref = highway_reference(x, params)
    assert out.shape == (B, F)
    assert jnp.allclose(out, ref, atol=1e-5, rtol=1e-5), "mismatch vs reference"

    print("KERNEL_OK")
</pallas_src>

<mosaic_0001>
module attributes {stable_mosaic.version = 11 : i64} {
  func.func @_highway_kernel(%arg0: i32, %arg1: i32, %arg2: memref<8x128xf32, #tpu.memory_space<vmem>>, %arg3: memref<1x128x384xf32, #tpu.memory_space<vmem>>, %arg4: memref<1x1x384xf32, #tpu.memory_space<vmem>>, %arg5: memref<8x128xf32, #tpu.memory_space<vmem>>) attributes {dimension_semantics = [#tpu.dimension_semantics<parallel>, #tpu.dimension_semantics<arbitrary>], iteration_bounds = array<i64: 1, 2>, scalar_prefetch = 0 : i64, scratch_operands = 0 : i64, tpu.core_type = #tpu.core_type<tc>, window_params = [{transform_indices = @transform_0, window_bounds = array<i64: 8, 128>}, {transform_indices = @transform_1, window_bounds = array<i64: 1, 128, 384>}, {transform_indices = @transform_2, window_bounds = array<i64: 1, 1, 384>}, {transform_indices = @transform_3, window_bounds = array<i64: 8, 128>}]} {
    %c0_i32 = arith.constant 0 : i32
    %0 = arith.cmpi eq, %arg1, %c0_i32 : i32
    %1 = arith.extui %0 : i1 to i32
    %c0_i32_0 = arith.constant 0 : i32
    %2 = arith.cmpi ne, %1, %c0_i32_0 : i32
    scf.if %2 {
      %c0_12 = arith.constant 0 : index
      %c0_13 = arith.constant 0 : index
      %25 = vector.load %arg2[%c0_12, %c0_13] : memref<8x128xf32, #tpu.memory_space<vmem>>, vector<8x128xf32>
      %c0_14 = arith.constant 0 : index
      %c0_15 = arith.constant 0 : index
      %26 = vector.load %arg5[%c0_14, %c0_15] : memref<8x128xf32, #tpu.memory_space<vmem>>, vector<8x128xf32>
      tpu.vector_store %arg5[%c0_14, %c0_15], %25 {strides = array<i32>} : memref<8x128xf32, #tpu.memory_space<vmem>>, vector<8x128xf32>,
    } else {
    }
    %c0 = arith.constant 0 : index
    %c0_1 = arith.constant 0 : index
    %3 = vector.load %arg5[%c0, %c0_1] : memref<8x128xf32, #tpu.memory_space<vmem>>, vector<8x128xf32>
    %c0_2 = arith.constant 0 : index
    %c0_3 = arith.constant 0 : index
    %c0_4 = arith.constant 0 : index
    %4 = vector.load %arg3[%c0_2, %c0_3, %c0_4] : memref<1x128x384xf32, #tpu.memory_space<vmem>>, vector<1x128x384xf32>
    %5 = vector.shape_cast %4 : vector<1x128x384xf32> to vector<128x384xf32>
    %cst = arith.constant dense<0.000000e+00> : vector<8x384xf32>
    %6 = tpu.matmul %3, %5, %cst {dimension_numbers = #tpu.dot_dimension_numbers<[1], [0], [0], [1], [0, 0, 1, 1], [], []>} : vector<8x128xf32>, vector<128x384xf32>, vector<8x384xf32> -> vector<8x384xf32>
    %c0_5 = arith.constant 0 : index
    %c0_6 = arith.constant 0 : index
    %c0_7 = arith.constant 0 : index
    %7 = vector.load %arg4[%c0_5, %c0_6, %c0_7] : memref<1x1x384xf32, #tpu.memory_space<vmem>>, vector<1x1x384xf32>
    %8 = vector.shape_cast %7 : vector<1x1x384xf32> to vector<1x384xf32>
    %9 = vector.broadcast %8 : vector<1x384xf32> to vector<8x384xf32>
    %10 = arith.addf %6, %9 : vector<8x384xf32>
    %11 = vector.extract_strided_slice %10 {offsets = [0, 0], sizes = [8, 128], strides = [1, 1]} : vector<8x384xf32> to vector<8x128xf32>
    %12 = arith.negf %11 : vector<8x128xf32>
    %13 = math.exp %12 : vector<8x128xf32>
    %cst_8 = arith.constant 1.000000e+00 : f32
    %14 = vector.broadcast %cst_8 : f32 to vector<8x128xf32>
    %15 = arith.addf %14, %13 : vector<8x128xf32>
    %16 = arith.divf %14, %15 : vector<8x128xf32>
    %17 = vector.extract_strided_slice %10 {offsets = [0, 128], sizes = [8, 128], strides = [1, 1]} : vector<8x384xf32> to vector<8x128xf32>
    %18 = vector.extract_strided_slice %10 {offsets = [0, 256], sizes = [8, 128], strides = [1, 1]} : vector<8x384xf32> to vector<8x128xf32>
    %cst_9 = arith.constant 0.000000e+00 : f32
    %19 = vector.broadcast %cst_9 : f32 to vector<8x128xf32>
    %20 = arith.maximumf %18, %19 : vector<8x128xf32>
    %21 = arith.subf %20, %17 : vector<8x128xf32>
    %22 = arith.mulf %16, %21 : vector<8x128xf32>
    %23 = arith.addf %17, %22 : vector<8x128xf32>
    %c0_10 = arith.constant 0 : index
    %c0_11 = arith.constant 0 : index
    %24 = vector.load %arg5[%c0_10, %c0_11] : memref<8x128xf32, #tpu.memory_space<vmem>>, vector<8x128xf32>
    tpu.vector_store %arg5[%c0_10, %c0_11], %23 {strides = array<i32>} : memref<8x128xf32, #tpu.memory_space<vmem>>, vector<8x128xf32>,
    return
  }
  func.func @transform_0(%arg0: i32, %arg1: i32) -> (i32, i32) {
    %c0_i32 = arith.constant 0 : i32
    %c0_i32_0 = arith.constant 0 : i32
    return %arg0, %c0_i32 : i32, i32
  }
  func.func @transform_1(%arg0: i32, %arg1: i32) -> (i32, i32, i32) {
    %c0_i32 = arith.constant 0 : i32
    %c0_i32_0 = arith.constant 0 : i32
    %c0_i32_1 = arith.constant 0 : i32
    return %arg1, %c0_i32, %c0_i32_0 : i32, i32, i32
  }
  func.func @transform_2(%arg0: i32, %arg1: i32) -> (i32, i32, i32) {
    %c0_i32 = arith.constant 0 : i32
    %c0_i32_0 = arith.constant 0 : i32
    %c0_i32_1 = arith.constant 0 : i32
    return %arg1, %c0_i32, %c0_i32_0 : i32, i32, i32
  }
  func.func @transform_3(%arg0: i32, %arg1: i32) -> (i32, i32) {
    %c0_i32 = arith.constant 0 : i32
    %c0_i32_0 = arith.constant 0 : i32
    return %arg0, %c0_i32 : i32, i32
  }
}

</mosaic_0001>

<llo_original>
// kernel: highway_forward.1
$region0: #{highway_forward.1}
  #allocation0 [shape = 'u32[]', space=smem, size = 0x4, offset = 0x4, fixed_abs, tag = 'smem constant byte address 0x4 - core index']
  #allocation1 [shape = 'u32[144,128]{1,0:T(1,128)}', space=vmem, size = 0x12000, scoped, tag = 'internal scratch']
  %s0 = inlined_call_operand.vmem [shape: f32[8,128], index: 0, kind: input, shape index: {}]
  %s1 = inlined_call_operand.hbm [shape: f32[2,128,384], index: 1, kind: input, shape index: {}]
  %s2 = inlined_call_operand.vmem [shape: f32[2,1,384], index: 2, kind: input, shape index: {}]
  %s3 = inlined_call_operand.hbm [shape: f32[8,128], index: 3, kind: output, shape index: {}]
  %s4 = sld [smem:[#allocation0]]
  $region53: #{highway_forward.1} parent=0
    _
  %s6 = ssub.s32 1, %s4
  %s7 = scalar_select 0, %s6, %s4
  $region1: #{highway_forward.1} parent=0
    #allocation2 [shape = 'u8[393216]{0}', space=vmem, size = 0x60000, scoped, tag = 'input window, operand 1']
    #allocation3 [shape = 's32[2]{0}', space=sflag, size = 0x8, scoped, tag = 'scoped memory for highway_forward.1']
    #allocation4 [shape = 's32[2]{0}', space=sflag, size = 0x8, scoped, tag = 'scoped memory for highway_forward.1']
    #allocation5 [shape = 'u8[4096]{0}', space=vmem, size = 0x1000, scoped, tag = 'output window, operand 0, single buffered']
    %8 = vsyncpa [#allocation3], 0
    %s9 = scalar_lea.sflag [#allocation3], 1
    %10 = vsyncpa %s9, 0
    %11 = vsyncpa [#allocation4], 0
    loop: start=0, step=1, limit=4
    $region2: #{highway_forward.1} parent=1 // loop_pre_header
      _
    $region3: #{highway_forward.1} parent=1 // loop_header
      %s13 = sphi 0, %s17
      %p14 = scmp.ge.s32.totalorder %s13, 4
      %s20 = sphi 0, %s32
      %s21 = sphi 0, %s28
      %s22 = sphi 0, %s20
      %s23 = sphi 0, %s21
      %s24 = sphi 0, %s22
      %s25 = sphi 0, %s23
      %s35 = sphi 0, %s37
      %s38 = sphi 0, %s35
      %s39 = sphi 0, %s38
      %s55 = sphi 0, %s39
      %s61 = sphi 0, %s63
      %s64 = sphi 0, %s61
      %s65 = sphi 0, %s64
      %s81 = sphi 0, %s65
      %s87 = sphi 0, %s89
      %s90 = sphi 0, %s87
      %s91 = sphi 0, %s90
      %s107 = sphi 0, %s91
      %s113 = sphi 0, %s115
      %s116 = sphi 0, %s113
      %s117 = sphi 0, %s116
      %s133 = sphi 0, %s117
    $region4: #{highway_forward.1} parent=1 // loop_header_branch
      %16 = sbr.rel (%p14) target = $region8
    $region5: #{highway_forward.1} parent=1 // loop_body
      %s18 = ssub.s32 %s13, 1
      %s19 = ssub.s32 %s13, 2
      %s26 = sadd.s32 1, %s21
      %p27 = scmp.ge.s32.totalorder %s26, 2
      %s28 = scalar_select %p27, 0, %s26
      %s29 = sadd.s32 1, %s20
      %s30 = scalar_select %p27, %s29, %s20
      %p31 = scmp.ge.s32.totalorder %s30, 1
      %s32 = scalar_select %p31, 0, %s30
      %s33 = ssub.s32 %s20, %s32
      %p34 = scmp.eq.s32.totalorder %s33, 0
      %s36 = sadd.s32 %s35, 1
      %s37 = scalar_select %p34, %s35, %s36
      %p40 = pneg %p34
      %p41 = scmp.eq.s32.totalorder %s13, 1
      %p42 = por %p40, %p41
      %p43 = scmp.ne.s32.totalorder %s35, %s38
      %p44 = scmp.eq.s32.totalorder %s13, 0
      %p45 = por %p43, %p44
      %p46 = scmp.ne.s32.totalorder %s35, %s38
      %p47 = scmp.eq.s32.totalorder %s18, 1
      %p48 = por %p46, %p47
      %p49 = scmp.ne.s32.totalorder %s38, %s39
      %p50 = scmp.eq.s32.totalorder %s18, 0
      %p51 = por %p49, %p50
      %p52 = scmp.ne.s32.totalorder %s38, %s39
      %p53 = scmp.eq.s32.totalorder %s19, 1
      %p54 = por %p52, %p53
      %p56 = scmp.ne.s32.totalorder %s39, %s55
      %p57 = scmp.eq.s32.totalorder %s19, 0
      %p58 = por %p56, %p57
      %s59 = ssub.s32 %s21, %s28
      %p60 = scmp.eq.s32.totalorder %s59, 0
      %s62 = sadd.s32 %s61, 1
      %s63 = scalar_select %p60, %s61, %s62
      %p66 = pneg %p60
      %p67 = scmp.eq.s32.totalorder %s13, 1
      %p68 = por %p66, %p67
      %p69 = scmp.ne.s32.totalorder %s61, %s64
      %p70 = scmp.eq.s32.totalorder %s13, 0
      %p71 = por %p69, %p70
      %p72 = scmp.ne.s32.totalorder %s61, %s64
      %p73 = scmp.eq.s32.totalorder %s18, 1
      %p74 = por %p72, %p73
      %p75 = scmp.ne.s32.totalorder %s64, %s65
      %p76 = scmp.eq.s32.totalorder %s18, 0
      %p77 = por %p75, %p76
      %p78 = scmp.ne.s32.totalorder %s64, %s65
      %p79 = scmp.eq.s32.totalorder %s19, 1
      %p80 = por %p78, %p79
      %p82 = scmp.ne.s32.totalorder %s65, %s81
      %p83 = scmp.eq.s32.totalorder %s19, 0
      %p84 = por %p82, %p83
      %s85 = ssub.s32 %s21, %s28
      %p86 = scmp.eq.s32.totalorder %s85, 0
      %s88 = sadd.s32 %s87, 1
      %s89 = scalar_select %p86, %s87, %s88
      %p92 = pneg %p86
      %p93 = scmp.eq.s32.totalorder %s13, 1
      %p94 = por %p92, %p93
      %p95 = scmp.ne.s32.totalorder %s87, %s90
      %p96 = scmp.eq.s32.totalorder %s13, 0
      %p97 = por %p95, %p96
      %p98 = scmp.ne.s32.totalorder %s87, %s90
      %p99 = scmp.eq.s32.totalorder %s18, 1
      %p100 = por %p98, %p99
      %p101 = scmp.ne.s32.totalorder %s90, %s91
      %p102 = scmp.eq.s32.totalorder %s18, 0
      %p103 = por %p101, %p102
      %p104 = scmp.ne.s32.totalorder %s90, %s91
      %p105 = scmp.eq.s32.totalorder %s19, 1
      %p106 = por %p104, %p105
      %p108 = scmp.ne.s32.totalorder %s91, %s107
      %p109 = scmp.eq.s32.totalorder %s19, 0
      %p110 = por %p108, %p109
      %s111 = ssub.s32 %s20, %s32
      %p112 = scmp.eq.s32.totalorder %s111, 0
      %s114 = sadd.s32 %s113, 1
      %s115 = scalar_select %p112, %s113, %s114
      %p118 = pneg %p112
      %p119 = scmp.eq.s32.totalorder %s13, 1
      %p120 = por %p118, %p119
      %p121 = scmp.ne.s32.totalorder %s113, %s116
      %p122 = scmp.eq.s32.totalorder %s13, 0
      %p123 = por %p121, %p122
      %p124 = scmp.ne.s32.totalorder %s113, %s116
      %p125 = scmp.eq.s32.totalorder %s18, 1
      %p126 = por %p124, %p125
      %p127 = scmp.ne.s32.totalorder %s116, %s117
      %p128 = scmp.eq.s32.totalorder %s18, 0
      %p129 = por %p127, %p128
      %p130 = scmp.ne.s32.totalorder %s116, %s117
      %p131 = scmp.eq.s32.totalorder %s19, 1
      %p132 = por %p130, %p131
      %p134 = scmp.ne.s32.totalorder %s117, %s133
      %p135 = scmp.eq.s32.totalorder %s19, 0
      %p136 = por %p134, %p135
      %p137 = scmp.le.s32.totalorder 1, %s13
      %p138 = scmp.lt.s32.totalorder %s13, 3
      %p139 = pnand %p137, %p138
      %p140 = pneg %p139
      // Predicated region
      $region9: #{highway_forward.1} parent=5 // pred_check
        _
      $region10: #{highway_forward.1} parent=5 // pred_check_branch
        %142 = sbr.rel (%p139) target = $region12
      $region11: #{highway_forward.1} parent=5 // pred_region
        %s143 = ssub.s32 %s13, 1
        // Predicated region
        $region13: #{highway_forward.1} parent=11 // pred_check
          %p144 = pneg %p51
        $region14: #{highway_forward.1} parent=11 // pred_check_branch
          %146 = sbr.rel (%p144) target = $region16
        $region15: #{highway_forward.1} parent=11 // pred_region
          %p147 = scmp.lt.s32.totalorder %s22, 0
          %s148 = scalar_select %p147, %s22, 0
          %s149 = smul.addr %s148, 8
          %s150 = scalar_lea.vmem %s0, %s149
        $region16: #{highway_forward.1} parent=11 // pred_fallthru
          _
      $region12: #{highway_forward.1} parent=5 // pred_fallthru
        _
      %p151 = scmp.lt.s32.totalorder %s13, 2
      // Predicated region
      $region17: #{highway_forward.1} parent=5 // pred_check
        %p152 = pneg %p151
      $region18: #{highway_forward.1} parent=5 // pred_check_branch
        %154 = sbr.rel (%p152) target = $region20
      $region19: #{highway_forward.1} parent=5 // pred_region
        // Predicated region
        $region21: #{highway_forward.1} parent=19 // pred_check
          %p155 = pneg %p71
        $region22: #{highway_forward.1} parent=19 // pred_check_branch
          %157 = sbr.rel (%p155) target = $region24
        $region23: #{highway_forward.1} parent=19 // pred_region
          %s158 = sand.u32 %s61, 1
          %s159 = scalar_lea.sflag [#allocation3], %s158
          %s160 = sand.u32 %s61, 1
          %s161 = smul.addr %s160, 384
          %s162 = scalar_lea.vmem [#allocation2], %s161
          %s164 = ssub.s32 6144, 6144
          %165 = vsyncadd %s159, %s164
          %s166 = smul.addr %s21, 48
          %s167 = smul.addr %s166, 128
          %s168 = scalar_lea.hbm %s1, %s167
          %s169 = sshll.u32 %s162, 4
          %s170 = int_to_ptr.vmem [resolvable:$true] %s169
          %175 = dma.hbm_to_vmem [thread:$0]  %s168, 6144, %s170, %s159, 384, 384, 24
        $region24: #{highway_forward.1} parent=19 // pred_fallthru
          _
        // Predicated region
        $region25: #{highway_forward.1} parent=19 // pred_check
          %p176 = pneg %p97
        $region26: #{highway_forward.1} parent=19 // pred_check_branch
          %178 = sbr.rel (%p176) target = $region28
        $region27: #{highway_forward.1} parent=19 // pred_region
          %p179 = scmp.lt.s32.totalorder %s21, 1
          %s180 = scalar_select %p179, %s21, 1
          %s181 = smul.addr %s180, 3
          %s182 = scalar_lea.vmem %s2, %s181
        $region28: #{highway_forward.1} parent=19 // pred_fallthru
          _
      $region20: #{highway_forward.1} parent=5 // pred_fallthru
        _
      %p183 = scmp.le.s32.totalorder 1, %s13
      %p184 = scmp.lt.s32.totalorder %s13, 3
      %p185 = pnand %p183, %p184
      %p186 = pneg %p185
      // Predicated region
      $region29: #{highway_forward.1} parent=5 // pred_check
        _
      $region30: #{highway_forward.1} parent=5 // pred_check_branch
        %188 = sbr.rel (%p185) target = $region32
      $region31: #{highway_forward.1} parent=5 // pred_region
        %s189 = ssub.s32 %s13, 1
        %s190 = sand.u32 %s64, 1
        %s191 = scalar_lea.sflag [#allocation3], %s190
        %s192 = sand.u32 %s64, 1
        %s193 = smul.addr %s192, 384
        %s194 = scalar_lea.vmem [#allocation2], %s193
        // Predicated region
        $region33: #{highway_forward.1} parent=31 // pred_check
          %p195 = pneg %p77
        $region34: #{highway_forward.1} parent=31 // pred_check_branch
          %197 = sbr.rel (%p195) target = $region36
        $region35: #{highway_forward.1} parent=31 // pred_region
          %198 = dma.done %s191, 6144
        $region36: #{highway_forward.1} parent=31 // pred_fallthru
          _
        %p199 = scmp.lt.s32.totalorder %s22, 0
        %s200 = scalar_select %p199, %s22, 0
        %s201 = smul.addr %s200, 8
        %s202 = scalar_lea.vmem %s0, %s201
        %p203 = pneg %p51
        %p204 = pneg %p48
        %s205 = sand.u32 %s64, 1
        %s206 = scalar_lea.sflag [#allocation3], %s205
        %s207 = sand.u32 %s64, 1
        %s208 = smul.addr %s207, 384
        %s209 = scalar_lea.vmem [#allocation2], %s208
        %p210 = pneg %p77
        %p211 = pneg %p74
        %p212 = scmp.lt.s32.totalorder %s23, 1
        %s213 = scalar_select %p212, %s23, 1
        %s214 = smul.addr %s213, 3
        %s215 = scalar_lea.vmem %s2, %s214
        %p216 = pneg %p103
        %p217 = pneg %p100
        %p218 = pneg %p129
        %p219 = pneg %p126
        %p220 = scmp.lt.s32.totalorder %s22, 0
        %s221 = scalar_select %p220, %s22, 0
        %s222 = smul.addr %s221, 8
        %s223 = scalar_lea.vmem %s0, %s222
        %p224 = scmp.lt.s32.totalorder %s23, 1
        %s225 = scalar_select %p224, %s23, 1
        %s226 = smul.addr %s225, 3
        %s227 = scalar_lea.vmem %s2, %s226
        %p228 = scmp.eq.s32.totalorder %s23, 0
        // Predicated region
        $region37: #{highway_forward.1} parent=31 // pred_check
          %p229 = pneg %p228
        $region38: #{highway_forward.1} parent=31 // pred_check_branch
          %231 = sbr.rel (%p229) target = $region40
        $region39: #{highway_forward.1} parent=31 // pred_region
          %v232 = vld [vmem:[%s223] sm:$0xff]
          %233 = vst [vmem:[#allocation5] sm:$0xff] %v232
        $region40: #{highway_forward.1} parent=31 // pred_fallthru
          _
        %v234 = vld [vmem:[#allocation5] sm:$0xff]
        %v235 = vld [vmem:[%s194] sm:$0xff]
        %v236 = vld [vmem:[%s194 + $0x8] sm:$0xff]
        %v237 = vld [vmem:[%s194 + $0x10] sm:$0xff]
        %v238 = vld [vmem:[%s194 + $0x18] sm:$0xff]
        %v239 = vld [vmem:[%s194 + $0x20] sm:$0xff]
        %v240 = vld [vmem:[%s194 + $0x28] sm:$0xff]
        %v241 = vld [vmem:[%s194 + $0x30] sm:$0xff]
        %v242 = vld [vmem:[%s194 + $0x38] sm:$0xff]
        %v243 = vld [vmem:[%s194 + $0x40] sm:$0xff]
        %v244 = vld [vmem:[%s194 + $0x48] sm:$0xff]
        %v245 = vld [vmem:[%s194 + $0x50] sm:$0xff]
        %v246 = vld [vmem:[%s194 + $0x58] sm:$0xff]
        %v247 = vld [vmem:[%s194 + $0x60] sm:$0xff]
        %v248 = vld [vmem:[%s194 + $0x68] sm:$0xff]
        %v249 = vld [vmem:[%s194 + $0x70] sm:$0xff]
        %v250 = vld [vmem:[%s194 + $0x78] sm:$0xff]
        %v251 = vld [vmem:[%s194 + $0x80] sm:$0xff]
        %v252 = vld [vmem:[%s194 + $0x88] sm:$0xff]
        %v253 = vld [vmem:[%s194 + $0x90] sm:$0xff]
        %v254 = vld [vmem:[%s194 + $0x98] sm:$0xff]
        %v255 = vld [vmem:[%s194 + $0xa0] sm:$0xff]
        %v256 = vld [vmem:[%s194 + $0xa8] sm:$0xff]
        %v257 = vld [vmem:[%s194 + $0xb0] sm:$0xff]
        %v258 = vld [vmem:[%s194 + $0xb8] sm:$0xff]
        %v259 = vld [vmem:[%s194 + $0xc0] sm:$0xff]
        %v260 = vld [vmem:[%s194 + $0xc8] sm:$0xff]
        %v261 = vld [vmem:[%s194 + $0xd0] sm:$0xff]
        %v262 = vld [vmem:[%s194 + $0xd8] sm:$0xff]
        %v263 = vld [vmem:[%s194 + $0xe0] sm:$0xff]
        %v264 = vld [vmem:[%s194 + $0xe8] sm:$0xff]
        %v265 = vld [vmem:[%s194 + $0xf0] sm:$0xff]
        %v266 = vld [vmem:[%s194 + $0xf8] sm:$0xff]
        %v267 = vld [vmem:[%s194 + $0x100] sm:$0xff]
        %v268 = vld [vmem:[%s194 + $0x108] sm:$0xff]
        %v269 = vld [vmem:[%s194 + $0x110] sm:$0xff]
        %v270 = vld [vmem:[%s194 + $0x118] sm:$0xff]
        %v271 = vld [vmem:[%s194 + $0x120] sm:$0xff]
        %v272 = vld [vmem:[%s194 + $0x128] sm:$0xff]
        %v273 = vld [vmem:[%s194 + $0x130] sm:$0xff]
        %v274 = vld [vmem:[%s194 + $0x138] sm:$0xff]
        %v275 = vld [vmem:[%s194 + $0x140] sm:$0xff]
        %v276 = vld [vmem:[%s194 + $0x148] sm:$0xff]
        %v277 = vld [vmem:[%s194 + $0x150] sm:$0xff]
        %v278 = vld [vmem:[%s194 + $0x158] sm:$0xff]
        %v279 = vld [vmem:[%s194 + $0x160] sm:$0xff]
        %v280 = vld [vmem:[%s194 + $0x168] sm:$0xff]
        %v281 = vld [vmem:[%s194 + $0x170] sm:$0xff]
        %v282 = vld [vmem:[%s194 + $0x178] sm:$0xff]
        %v283 = vld [vmem:[%s227] sm:$0x7]
        %v285 = vlaneseq
        %v286 = vshrl.u32 %v285, 7
        %v287 = vsub.s32 0, %v286
        %v288 = vrot.slane %v283, %v287
        %v289 = vlaneseq
        %v290 = vshrl.u32 %v289, 7
        %v291 = vsub.s32 1, %v290
        %v292 = vrot.slane %v283, %v291
        %v293 = vlaneseq
        %v294 = vshrl.u32 %v293, 7
        %v295 = vsub.s32 2, %v294
        %v296 = vrot.slane %v283, %v295
        %300 = vmatprep.subr.mxu0 %v236
        %301 = vmatpush1.msra.mxu0 %v235
        %302 = vmatprep.subr.mxu0 %v239
        %303 = vmatpush1.msra.mxu0 %v238
        %304 = vmatprep.subr.mxu0 %v242
        %305 = vmatpush1.msra.mxu0 %v241
        %306 = vmatprep.subr.mxu0 %v245
        %307 = vmatpush1.msra.mxu0 %v244
        %308 = vmatprep.subr.mxu0 %v248
        %309 = vmatpush1.msra.mxu0 %v247
        %310 = vmatprep.subr.mxu0 %v251
        %311 = vmatpush1.msra.mxu0 %v250
        %312 = vmatprep.subr.mxu0 %v254
        %313 = vmatpush1.msra.mxu0 %v253
        %314 = vmatprep.subr.mxu0 %v257
        %315 = vmatpush1.msra.mxu0 %v256
        %316 = vmatprep.subr.mxu0 %v260
        %317 = vmatpush1.msra.mxu0 %v259
        %318 = vmatprep.subr.mxu0 %v263
        %319 = vmatpush1.msra.mxu0 %v262
        %320 = vmatprep.subr.mxu0 %v266
        %321 = vmatpush1.msra.mxu0 %v265
        %322 = vmatprep.subr.mxu0 %v269
        %323 = vmatpush1.msra.mxu0 %v268
        %324 = vmatprep.subr.mxu0 %v272
        %325 = vmatpush1.msra.mxu0 %v271
        %326 = vmatprep.subr.mxu0 %v275
        %327 = vmatpush1.msra.mxu0 %v274
        %328 = vmatprep.subr.mxu0 %v278
        %329 = vmatpush1.msra.mxu0 %v277
        %330 = vmatprep.subr.mxu0 %v281
        %331 = vmatpush1.msra.mxu0 %v280
        %332 = vmatprep.subr.mxu0 0.0
        %333 = vmatpush1.msra.mxu0 0.0
        %334 = vmatprep.subr.mxu0 0.0
        %335 = vmatpush1.msra.mxu0 0.0
        %336 = vmatprep.subr.mxu0 0.0
        %337 = vmatpush1.msra.mxu0 0.0
        %338 = vmatprep.subr.mxu0 0.0
        %339 = vmatpush1.msra.mxu0 0.0
        %340 = vmatprep.subr.mxu0 0.0
        %341 = vmatpush1.msra.mxu0 0.0
        %342 = vmatprep.subr.mxu0 0.0
        %343 = vmatpush1.msra.mxu0 0.0
        %344 = vmatprep.subr.mxu0 0.0
        %345 = vmatpush1.msra.mxu0 0.0
        %346 = vmatprep.subr.mxu0 0.0
        %347 = vmatpush1.msra.mxu0 0.0
        %348 = vmatprep.subr.mxu0 0.0
        %349 = vmatpush1.msra.mxu0 0.0
        %350 = vmatprep.subr.mxu0 0.0
        %351 = vmatpush1.msra.mxu0 0.0
        %352 = vmatprep.subr.mxu0 0.0
        %353 = vmatpush1.msra.mxu0 0.0
        %354 = vmatprep.subr.mxu0 0.0
        %355 = vmatpush1.msra.mxu0 0.0
        %356 = vmatprep.subr.mxu0 0.0
        %357 = vmatpush1.msra.mxu0 0.0
        %358 = vmatprep.subr.mxu0 0.0
        %359 = vmatpush1.msra.mxu0 0.0
        %360 = vmatprep.subr.mxu0 0.0
        %361 = vmatpush1.msra.mxu0 0.0
        %362 = vmatprep.subr.mxu0 0.0
        %363 = vmatpush1.msra.mxu0 0.0
        %364 = vmatprep.mubr.f32.mxu0 0.0
        %365 = vmatmul.mubr.f32.gmra.mrb[0].mxu0 %v234
        %v366 = vpop.f32.mrb[0].mxu0
        %v367 = vadd.f32 %v288, %v366
        %v368 = vpop.f32.mrb[0].mxu0
        %v369 = vadd.f32 %v292, %v368
        %370 = vdwg.mxu0
        %371 = vmatprep.subr.mxu0 0.0
        %372 = vmatpush1.msra.mxu0 %v237
        %373 = vmatprep.subr.mxu0 0.0
        %374 = vmatpush1.msra.mxu0 %v240
        %375 = vmatprep.subr.mxu0 0.0
        %376 = vmatpush1.msra.mxu0 %v243
        %377 = vmatprep.subr.mxu0 0.0
        %378 = vmatpush1.msra.mxu0 %v246
        %379 = vmatprep.subr.mxu0 0.0
        %380 = vmatpush1.msra.mxu0 %v249
        %381 = vmatprep.subr.mxu0 0.0
        %382 = vmatpush1.msra.mxu0 %v252
        %383 = vmatprep.subr.mxu0 0.0
        %384 = vmatpush1.msra.mxu0 %v255
        %385 = vmatprep.subr.mxu0 0.0
        %386 = vmatpush1.msra.mxu0 %v258
        %387 = vmatprep.subr.mxu0 0.0
        %388 = vmatpush1.msra.mxu0 %v261
        %389 = vmatprep.subr.mxu0 0.0
        %390 = vmatpush1.msra.mxu0 %v264
        %391 = vmatprep.subr.mxu0 0.0
        %392 = vmatpush1.msra.mxu0 %v267
        %393 = vmatprep.subr.mxu0 0.0
        %394 = vmatpush1.msra.mxu0 %v270
        %395 = vmatprep.subr.mxu0 0.0
        %396 = vmatpush1.msra.mxu0 %v273
        %397 = vmatprep.subr.mxu0 0.0
        %398 = vmatpush1.msra.mxu0 %v276
        %399 = vmatprep.subr.mxu0 0.0
        %400 = vmatpush1.msra.mxu0 %v279
        %401 = vmatprep.subr.mxu0 0.0
        %402 = vmatpush1.msra.mxu0 %v282
        %403 = vmatprep.subr.mxu0 0.0
        %404 = vmatpush1.msra.mxu0 0.0
        %405 = vmatprep.subr.mxu0 0.0
        %406 = vmatpush1.msra.mxu0 0.0
        %407 = vmatprep.subr.mxu0 0.0
        %408 = vmatpush1.msra.mxu0 0.0
        %409 = vmatprep.subr.mxu0 0.0
        %410 = vmatpush1.msra.mxu0 0.0
        %411 = vmatprep.subr.mxu0 0.0
        %412 = vmatpush1.msra.mxu0 0.0
        %413 = vmatprep.subr.mxu0 0.0
        %414 = vmatpush1.msra.mxu0 0.0
        %415 = vmatprep.subr.mxu0 0.0
        %416 = vmatpush1.msra.mxu0 0.0
        %417 = vmatprep.subr.mxu0 0.0
        %418 = vmatpush1.msra.mxu0 0.0
        %419 = vmatprep.subr.mxu0 0.0
        %420 = vmatpush1.msra.mxu0 0.0
        %421 = vmatprep.subr.mxu0 0.0
        %422 = vmatpush1.msra.mxu0 0.0
        %423 = vmatprep.subr.mxu0 0.0
        %424 = vmatpush1.msra.mxu0 0.0
        %425 = vmatprep.subr.mxu0 0.0
        %426 = vmatpush1.msra.mxu0 0.0
        %427 = vmatprep.subr.mxu0 0.0
        %428 = vmatpush1.msra.mxu0 0.0
        %429 = vmatprep.subr.mxu0 0.0
        %430 = vmatpush1.msra.mxu0 0.0
        %431 = vmatprep.subr.mxu0 0.0
        %432 = vmatpush1.msra.mxu0 0.0
        %433 = vmatprep.subr.mxu0 0.0
        %434 = vmatpush1.msra.mxu0 0.0
        %435 = vmatprep.mubr.f32.mxu0 0.0
        %436 = vmatmul.mubr.f32.gmra.mrb[0].mxu0 %v234
        %v437 = vpop.f32.mrb[0].mxu0
        %v438 = vadd.f32 %v296, %v437
        %v439 = vpop.f32.mrb[0].mxu0
        %440 = vdwg.mxu0
        %v441 = vxor.u32 %v367, 2147483648
        %v442 = vmul.f32 %v441, 1.442695
        %v443 = vpow.pop %v442
        %v444 = vadd.f32 %v443, 1.0
        %v445 = vrcp.pop %v444
        %v446 = vmul.f32 1.0, %v445
        %v447 = vmax.f32 %v438, 0.0
        %v448 = vsub.f32 %v447, %v369
        %v449 = vmul.f32 %v446, %v448
        %v450 = vadd.f32 %v369, %v449
        %451 = vst [vmem:[#allocation5] sm:$0xff] %v450
        // Predicated region
        $region41: #{highway_forward.1} parent=31 // pred_check
          %p452 = pneg %p126
        $region42: #{highway_forward.1} parent=31 // pred_check_branch
          %454 = sbr.rel (%p452) target = $region44
        $region43: #{highway_forward.1} parent=31 // pred_region
          %s456 = ssub.s32 128, 128
          %457 = vsyncadd [#allocation4], %s456
          %s458 = smul.addr %s22, 128
          %s459 = scalar_lea.hbm %s3, %s458
          %s461 = sshll.u32 [#allocation5], 4
          %s462 = int_to_ptr.vmem [resolvable:$true] %s461
          %464 = dma.vmem_to_hbm [thread:$0]  %s462, 128, %s459, [#allocation4]
        $region44: #{highway_forward.1} parent=31 // pred_fallthru
          _
        // Predicated region
        $region45: #{highway_forward.1} parent=31 // pred_check
          %p465 = pneg %p126
        $region46: #{highway_forward.1} parent=31 // pred_check_branch
          %467 = sbr.rel (%p465) target = $region48
        $region47: #{highway_forward.1} parent=31 // pred_region
          %468 = dma.done [#allocation4], 128
        $region48: #{highway_forward.1} parent=31 // pred_fallthru
          _
      $region32: #{highway_forward.1} parent=5 // pred_fallthru
        _
      %p469 = scmp.le.s32.totalorder 2, %s13
      // Predicated region
      $region49: #{highway_forward.1} parent=5 // pred_check
        %p470 = pneg %p469
      $region50: #{highway_forward.1} parent=5 // pred_check_branch
        %472 = sbr.rel (%p470) target = $region52
      $region51: #{highway_forward.1} parent=5 // pred_region
        %s473 = ssub.s32 %s13, 2
      $region52: #{highway_forward.1} parent=5 // pred_fallthru
        _
    $region6: #{highway_forward.1} parent=1 // loop_footer
      %s17 = sadd.s32 1, %s13
    $region7: #{highway_forward.1} parent=1 // loop_footer_branch
      %12 = sbr.rel target = $region3
    $region8: #{highway_forward.1} parent=1 // loop_exit
      _
    %474 = vsyncpa [#allocation3], 1
    %s475 = scalar_lea.sflag [#allocation3], 1
    %476 = vsyncpa %s475, 1
    %477 = vsyncpa [#allocation4], 1
    %s478 = scalar_lea.sflag [#allocation4], 1
    %479 = vsyncpa %s478, 1

</llo_original>
